<compile_context>
chip_gen: v6e
topology: v6e:2x2x1
jax: 0.10.0
libtpu: 0.0.40
codegen_flags: <defaults>
</compile_context>

<pallas_src>
import functools

import jax
import jax.numpy as jnp
from jax.experimental import pallas as pl
from jax.experimental.pallas import tpu as pltpu

_NEG_BIG = -1e30  # effectively -inf for the masked (padded) class lanes


def gcn_layer_relu_kernel(a_ref, x_ref, w_ref, b_ref, o_ref):
    """One row-tile of  relu(A_tile @ X @ W + b)  -> bf16 output tile."""
    ax = jnp.dot(a_ref[...], x_ref[...], preferred_element_type=jnp.float32)
    z = jnp.dot(ax.astype(jnp.bfloat16), w_ref[...],
                preferred_element_type=jnp.float32)
    z = z + b_ref[...]                      # bias resident, broadcast once per tile
    o_ref[...] = jnp.maximum(z, 0.0).astype(o_ref.dtype)
    # TODO(synk): F.dropout(x, training=self.training) — inference-mode identity here.


def gcn_layer_logsoftmax_kernel(a_ref, h_ref, w_ref, b_ref, o_ref, *, num_classes):
    """One row-tile of  log_softmax(A_tile @ H @ W + b)  over the (padded) class dim."""
    ah = jnp.dot(a_ref[...], h_ref[...], preferred_element_type=jnp.float32)
    z = jnp.dot(ah.astype(jnp.bfloat16), w_ref[...],
                preferred_element_type=jnp.float32)
    z = z + b_ref[...]
    # Mask padded class lanes so they do not contribute to max / sum.
    col = jax.lax.broadcasted_iota(jnp.int32, z.shape, dimension=1)
    z = jnp.where(col < num_classes, z, _NEG_BIG)
    m = jnp.max(z, axis=1, keepdims=True)
    lse = jnp.log(jnp.sum(jnp.exp(z - m), axis=1, keepdims=True)) + m
    o_ref[...] = z - lse


def _pad2d(x, rows, cols):
    return jnp.pad(x, ((0, rows - x.shape[0]), (0, cols - x.shape[1])))


def _round_up(v, m):
    return ((v + m - 1) // m) * m


def gcn_forward(a_hat, x, w1, b1, w2, b2, *, tile_n=128):
    N, F = x.shape
    H = w1.shape[1]
    C = w2.shape[1]

    N_pad = _round_up(N, tile_n)
    F_pad = _round_up(F, 128)
    H_pad = _round_up(H, 128)
    C_pad = _round_up(C, 128)

    # bf16 MXU operands, f32 biases.
    a_p = _pad2d(a_hat, N_pad, N_pad).astype(jnp.bfloat16)
    x_p = _pad2d(x, N_pad, F_pad).astype(jnp.bfloat16)
    w1_p = _pad2d(w1, F_pad, H_pad).astype(jnp.bfloat16)
    b1_p = _pad2d(b1, 1, H_pad).astype(jnp.float32)
    w2_p = _pad2d(w2, H_pad, C_pad).astype(jnp.bfloat16)
    b2_p = _pad2d(b2, 1, C_pad).astype(jnp.float32)

    grid = (N_pad // tile_n,)
    cparams = pltpu.CompilerParams(
        dimension_semantics=("parallel",),          # row tiles shard across TCs (v7x)
        vmem_limit_bytes=48 * 1024 * 1024)          # fits v7x 64 MiB physical VMEM

    def row_spec(cols):
        return pl.BlockSpec((tile_n, cols), lambda i: (i, 0))

    def resident_spec(shape):
        return pl.BlockSpec(shape, lambda i: (0, 0))

    # ---- Layer 1: H = relu(A @ X @ W1 + b1), bf16 output (feeds layer-2 MXU) ----
    h = pl.pallas_call(
        gcn_layer_relu_kernel,
        out_shape=jax.ShapeDtypeStruct((N_pad, H_pad), jnp.bfloat16),
        grid=grid,
        in_specs=[row_spec(N_pad),                  # A_hat row tile
                  resident_spec((N_pad, F_pad)),    # X resident
                  resident_spec((F_pad, H_pad)),    # W1 resident
                  resident_spec((1, H_pad))],       # b1 resident
        out_specs=row_spec(H_pad),
        compiler_params=cparams,
    )(a_p, x_p, w1_p, b1_p)

    # ---- Layer 2: out = log_softmax(A @ H @ W2 + b2), f32 output ----
    out = pl.pallas_call(
        functools.partial(gcn_layer_logsoftmax_kernel, num_classes=C),
        out_shape=jax.ShapeDtypeStruct((N_pad, C_pad), jnp.float32),
        grid=grid,
        in_specs=[row_spec(N_pad),                  # A_hat row tile
                  resident_spec((N_pad, H_pad)),    # H resident
                  resident_spec((H_pad, C_pad)),    # W2 resident
                  resident_spec((1, C_pad))],       # b2 resident
        out_specs=row_spec(C_pad),
        compiler_params=cparams,
    )(a_p, h, w2_p, b2_p)

    return out[:N, :C]


def build_normalized_adj(edge_index, num_nodes):
    """A_hat = D^{-1/2} (A + I) D^{-1/2} — default GCNConv normalization (dense)."""
    src, dst = edge_index[0], edge_index[1]
    a = jnp.zeros((num_nodes, num_nodes), jnp.float32).at[dst, src].set(1.0)
    a = a + jnp.eye(num_nodes, dtype=jnp.float32)       # add self loops
    deg = jnp.sum(a, axis=1)
    d_inv_sqrt = jnp.where(deg > 0, 1.0 / jnp.sqrt(deg), 0.0)
    return a * d_inv_sqrt[:, None] * d_inv_sqrt[None, :]


def gcn_reference(a_hat, x, w1, b1, w2, b2):
    """Pure-JAX f32 reference for correctness checking."""
    h = jnp.maximum(a_hat @ (x @ w1) + b1, 0.0)
    z = a_hat @ (h @ w2) + b2
    return jax.nn.log_softmax(z, axis=1)


if __name__ == "__main__":
    # Small synthetic "Cora-like" problem (2 row tiles -> exercises the grid).
    N = 256      # nodes
    F_IN = 64    # num_node_features
    H = 16       # hidden (as in the module)
    C = 8        # num_classes

    key = jax.random.PRNGKey(0)
    kx, kw1, kb1, kw2, kb2 = jax.random.split(key, 5)

    # Deterministic ring graph, both directions: edge_index shape (2, 2N).
    idx = jnp.arange(N, dtype=jnp.int32)
    src = jnp.concatenate([idx, (idx + 1) % N])
    dst = jnp.concatenate([(idx + 1) % N, idx])
    edge_index = jnp.stack([src, dst], axis=0)

    x = jax.random.normal(kx, (N, F_IN), dtype=jnp.float32)

    # Glorot-style deterministic init (GCNConv uses glorot weights).
    w1 = jax.random.normal(kw1, (F_IN, H), jnp.float32) * jnp.sqrt(2.0 / (F_IN + H))
    b1 = jax.random.normal(kb1, (1, H), jnp.float32) * 0.01
    w2 = jax.random.normal(kw2, (H, C), jnp.float32) * jnp.sqrt(2.0 / (H + C))
    b2 = jax.random.normal(kb2, (1, C), jnp.float32) * 0.01

    a_hat = build_normalized_adj(edge_index, N)

    out = gcn_forward(a_hat, x, w1, b1, w2, b2)
    out = jax.block_until_ready(out)

    # Sanity 1: log_softmax rows must exp-sum to ~1.
    row_sums = jnp.sum(jnp.exp(out), axis=1)
    assert out.shape == (N, C)
    assert bool(jnp.all(jnp.abs(row_sums - 1.0) < 1e-3))

    # Sanity 2: close to the f32 reference (loose tolerance: bf16 MXU inputs).
    ref = gcn_reference(a_hat, x, w1, b1, w2, b2)
    assert bool(jnp.max(jnp.abs(out - ref)) < 0.2)

    print("KERNEL_OK")
</pallas_src>

<mosaic_0001>
module attributes {stable_mosaic.version = 11 : i64} {
  func.func @gcn_layer_relu_kernel(%arg0: i32, %arg1: memref<128x256xbf16, #tpu.memory_space<vmem>>, %arg2: memref<256x128xbf16, #tpu.memory_space<vmem>>, %arg3: memref<128x128xbf16, #tpu.memory_space<vmem>>, %arg4: memref<1x128xf32, #tpu.memory_space<vmem>>, %arg5: memref<128x128xbf16, #tpu.memory_space<vmem>>) attributes {dimension_semantics = [#tpu.dimension_semantics<parallel>], iteration_bounds = array<i64: 2>, scalar_prefetch = 0 : i64, scratch_operands = 0 : i64, tpu.core_type = #tpu.core_type<tc>, window_params = [{transform_indices = @transform_0, window_bounds = array<i64: 128, 256>}, {pipeline_mode = #tpu.pipeline_mode<synchronous>, transform_indices = @transform_1, window_bounds = array<i64: 256, 128>}, {pipeline_mode = #tpu.pipeline_mode<synchronous>, transform_indices = @transform_2, window_bounds = array<i64: 128, 128>}, {pipeline_mode = #tpu.pipeline_mode<synchronous>, transform_indices = @transform_3, window_bounds = array<i64: 1, 128>}, {transform_indices = @transform_4, window_bounds = array<i64: 128, 128>}]} {
    %c0 = arith.constant 0 : index
    %c0_0 = arith.constant 0 : index
    %0 = vector.load %arg1[%c0, %c0_0] : memref<128x256xbf16, #tpu.memory_space<vmem>>, vector<128x256xbf16>
    %c0_1 = arith.constant 0 : index
    %c0_2 = arith.constant 0 : index
    %1 = vector.load %arg2[%c0_1, %c0_2] : memref<256x128xbf16, #tpu.memory_space<vmem>>, vector<256x128xbf16>
    %cst = arith.constant dense<0.000000e+00> : vector<128x128xf32>
    %2 = tpu.matmul %0, %1, %cst {dimension_numbers = #tpu.dot_dimension_numbers<[1], [0], [0], [1], [0, 0, 1, 1], [], []>} : vector<128x256xbf16>, vector<256x128xbf16>, vector<128x128xf32> -> vector<128x128xf32>
    %3 = arith.truncf %2 : vector<128x128xf32> to vector<128x128xbf16>
    %c0_3 = arith.constant 0 : index
    %c0_4 = arith.constant 0 : index
    %4 = vector.load %arg3[%c0_3, %c0_4] : memref<128x128xbf16, #tpu.memory_space<vmem>>, vector<128x128xbf16>
    %cst_5 = arith.constant dense<0.000000e+00> : vector<128x128xf32>
    %5 = tpu.matmul %3, %4, %cst_5 {dimension_numbers = #tpu.dot_dimension_numbers<[1], [0], [0], [1], [0, 0, 1, 1], [], []>} : vector<128x128xbf16>, vector<128x128xbf16>, vector<128x128xf32> -> vector<128x128xf32>
    %c0_6 = arith.constant 0 : index
    %c0_7 = arith.constant 0 : index
    %6 = vector.load %arg4[%c0_6, %c0_7] : memref<1x128xf32, #tpu.memory_space<vmem>>, vector<1x128xf32>
    %7 = vector.broadcast %6 : vector<1x128xf32> to vector<128x128xf32>
    %8 = arith.addf %5, %7 : vector<128x128xf32>
    %cst_8 = arith.constant 0.000000e+00 : f32
    %9 = vector.broadcast %cst_8 : f32 to vector<128x128xf32>
    %10 = arith.maximumf %8, %9 : vector<128x128xf32>
    %11 = arith.truncf %10 : vector<128x128xf32> to vector<128x128xbf16>
    %c0_9 = arith.constant 0 : index
    %c0_10 = arith.constant 0 : index
    %12 = vector.load %arg5[%c0_9, %c0_10] : memref<128x128xbf16, #tpu.memory_space<vmem>>, vector<128x128xbf16>
    tpu.vector_store %arg5[%c0_9, %c0_10], %11 {strides = array<i32>} : memref<128x128xbf16, #tpu.memory_space<vmem>>, vector<128x128xbf16>,
    return
  }
  func.func @transform_0(%arg0: i32) -> (i32, i32) {
    %c0_i32 = arith.constant 0 : i32
    %c0_i32_0 = arith.constant 0 : i32
    return %arg0, %c0_i32 : i32, i32
  }
  func.func @transform_1(%arg0: i32) -> (i32, i32) {
    %c0_i32 = arith.constant 0 : i32
    %c0_i32_0 = arith.constant 0 : i32
    %c0_i32_1 = arith.constant 0 : i32
    return %c0_i32, %c0_i32_0 : i32, i32
  }
  func.func @transform_2(%arg0: i32) -> (i32, i32) {
    %c0_i32 = arith.constant 0 : i32
    %c0_i32_0 = arith.constant 0 : i32
    %c0_i32_1 = arith.constant 0 : i32
    return %c0_i32, %c0_i32_0 : i32, i32
  }
  func.func @transform_3(%arg0: i32) -> (i32, i32) {
    %c0_i32 = arith.constant 0 : i32
    %c0_i32_0 = arith.constant 0 : i32
    %c0_i32_1 = arith.constant 0 : i32
    return %c0_i32, %c0_i32_0 : i32, i32
  }
  func.func @transform_4(%arg0: i32) -> (i32, i32) {
    %c0_i32 = arith.constant 0 : i32
    %c0_i32_0 = arith.constant 0 : i32
    return %arg0, %c0_i32 : i32, i32
  }
}

</mosaic_0001>

<llo_original>
// kernel: tpu_custom_call.1
$region0: #{tpu_custom_call.1}
  #allocation0 [shape = 'u32[]', space=smem, size = 0x4, offset = 0x4, fixed_abs, tag = 'smem constant byte address 0x4 - core index']
  #allocation1 [shape = 'u32[144,128]{1,0:T(1,128)}', space=vmem, size = 0x12000, scoped, tag = 'internal scratch']
  %s0 = inlined_call_operand.hbm [shape: bf16[256,256], index: 0, kind: input, shape index: {}]
  %s1 = inlined_call_operand.hbm [shape: bf16[256,128], index: 1, kind: input, shape index: {}]
  %s2 = inlined_call_operand.hbm [shape: bf16[128,128], index: 2, kind: input, shape index: {}]
  %s3 = inlined_call_operand.vmem [shape: f32[1,128], index: 3, kind: input, shape index: {}]
  %s4 = inlined_call_operand.hbm [shape: bf16[256,128], index: 4, kind: output, shape index: {}]
  %s5 = sld [smem:[#allocation0]]
  $region61: #{tpu_custom_call.1} parent=0
    _
  %s7 = ssub.s32 1, %s5
  %s8 = scalar_select 0, %s7, %s5
  $region1: #{tpu_custom_call.1} parent=0
    #allocation2 [shape = 'u8[131072]{0}', space=vmem, size = 0x20000, scoped, tag = 'input window, operand 0']
    #allocation3 [shape = 's32[2]{0}', space=sflag, size = 0x8, scoped, tag = 'scoped memory for tpu_custom_call.1']
    #allocation4 [shape = 's32[2]{0}', space=sflag, size = 0x8, scoped, tag = 'scoped memory for tpu_custom_call.1']
    #allocation5 [shape = 'u8[65536]{0}', space=vmem, size = 0x10000, scoped, tag = 'input window, operand 1, single buffered']
    #allocation6 [shape = 's32[1]{0}', space=sflag, size = 0x4, scoped, tag = 'scoped memory for tpu_custom_call.1']
    #allocation7 [shape = 'u8[32768]{0}', space=vmem, size = 0x8000, scoped, tag = 'input window, operand 2, single buffered']
    #allocation8 [shape = 'u8[65536]{0}', space=vmem, size = 0x10000, scoped, tag = 'output window, operand 0']
    %9 = vsyncpa [#allocation3], 0
    %s10 = scalar_lea.sflag [#allocation3], 1
    %11 = vsyncpa %s10, 0
    %12 = vsyncpa [#allocation6], 0
    %13 = vsyncpa [#allocation4], 0
    %s14 = scalar_lea.sflag [#allocation4], 1
    %15 = vsyncpa %s14, 0
    loop: start=0, step=1, limit=4
    $region2: #{tpu_custom_call.1} parent=1 // loop_pre_header
      _
    $region3: #{tpu_custom_call.1} parent=1 // loop_header
      %s17 = sphi 0, %s21
      %p18 = scmp.ge.s32.totalorder %s17, 4
      %s27 = sphi 0, %s29
      %s30 = sphi 0, %s27
      %s31 = sphi 0, %s30
      %s47 = sphi 0, %s31
      %s51 = sphi 0, %s51
      %s53 = sphi 0, %s51
      %s54 = sphi 0, %s53
      %s68 = sphi 0, %s54
      %s72 = sphi 0, %s72
      %s74 = sphi 0, %s72
      %s75 = sphi 0, %s74
      %s89 = sphi 0, %s75
      %s93 = sphi 0, %s93
      %s95 = sphi 0, %s93
      %s96 = sphi 0, %s95
      %s110 = sphi 0, %s96
      %s116 = sphi 0, %s118
      %s119 = sphi 0, %s116
      %s120 = sphi 0, %s119
      %s136 = sphi 0, %s120
    $region4: #{tpu_custom_call.1} parent=1 // loop_header_branch
      %20 = sbr.rel (%p18) target = $region8
    $region5: #{tpu_custom_call.1} parent=1 // loop_body
      %s22 = ssub.s32 %s17, 1
      %s23 = ssub.s32 %s17, 2
      %s24 = sadd.s32 %s17, 1
      %s25 = ssub.s32 %s17, %s24
      %p26 = scmp.eq.s32.totalorder %s25, 0
      %s28 = sadd.s32 %s27, 1
      %s29 = scalar_select %p26, %s27, %s28
      %p32 = pneg %p26
      %p33 = scmp.eq.s32.totalorder %s17, 1
      %p34 = por %p32, %p33
      %p35 = scmp.ne.s32.totalorder %s27, %s30
      %p36 = scmp.eq.s32.totalorder %s17, 0
      %p37 = por %p35, %p36
      %p38 = scmp.ne.s32.totalorder %s27, %s30
      %p39 = scmp.eq.s32.totalorder %s22, 1
      %p40 = por %p38, %p39
      %p41 = scmp.ne.s32.totalorder %s30, %s31
      %p42 = scmp.eq.s32.totalorder %s22, 0
      %p43 = por %p41, %p42
      %p44 = scmp.ne.s32.totalorder %s30, %s31
      %p45 = scmp.eq.s32.totalorder %s23, 1
      %p46 = por %p44, %p45
      %p48 = scmp.ne.s32.totalorder %s31, %s47
      %p49 = scmp.eq.s32.totalorder %s23, 0
      %p50 = por %p48, %p49
      %s52 = sadd.s32 %s51, 1
      %p55 = scmp.eq.s32.totalorder %s17, 1
      %p56 = scmp.ne.s32.totalorder %s51, %s53
      %p57 = scmp.eq.s32.totalorder %s17, 0
      %p58 = por %p56, %p57
      %p59 = scmp.ne.s32.totalorder %s51, %s53
      %p60 = scmp.eq.s32.totalorder %s22, 1
      %p61 = por %p59, %p60
      %p62 = scmp.ne.s32.totalorder %s53, %s54
      %p63 = scmp.eq.s32.totalorder %s22, 0
      %p64 = por %p62, %p63
      %p65 = scmp.ne.s32.totalorder %s53, %s54
      %p66 = scmp.eq.s32.totalorder %s23, 1
      %p67 = por %p65, %p66
      %p69 = scmp.ne.s32.totalorder %s54, %s68
      %p70 = scmp.eq.s32.totalorder %s23, 0
      %p71 = por %p69, %p70
      %s73 = sadd.s32 %s72, 1
      %p76 = scmp.eq.s32.totalorder %s17, 1
      %p77 = scmp.ne.s32.totalorder %s72, %s74
      %p78 = scmp.eq.s32.totalorder %s17, 0
      %p79 = por %p77, %p78
      %p80 = scmp.ne.s32.totalorder %s72, %s74
      %p81 = scmp.eq.s32.totalorder %s22, 1
      %p82 = por %p80, %p81
      %p83 = scmp.ne.s32.totalorder %s74, %s75
      %p84 = scmp.eq.s32.totalorder %s22, 0
      %p85 = por %p83, %p84
      %p86 = scmp.ne.s32.totalorder %s74, %s75
      %p87 = scmp.eq.s32.totalorder %s23, 1
      %p88 = por %p86, %p87
      %p90 = scmp.ne.s32.totalorder %s75, %s89
      %p91 = scmp.eq.s32.totalorder %s23, 0
      %p92 = por %p90, %p91
      %s94 = sadd.s32 %s93, 1
      %p97 = scmp.eq.s32.totalorder %s17, 1
      %p98 = scmp.ne.s32.totalorder %s93, %s95
      %p99 = scmp.eq.s32.totalorder %s17, 0
      %p100 = por %p98, %p99
      %p101 = scmp.ne.s32.totalorder %s93, %s95
      %p102 = scmp.eq.s32.totalorder %s22, 1
      %p103 = por %p101, %p102
      %p104 = scmp.ne.s32.totalorder %s95, %s96
      %p105 = scmp.eq.s32.totalorder %s22, 0
      %p106 = por %p104, %p105
      %p107 = scmp.ne.s32.totalorder %s95, %s96
      %p108 = scmp.eq.s32.totalorder %s23, 1
      %p109 = por %p107, %p108
      %p111 = scmp.ne.s32.totalorder %s96, %s110
      %p112 = scmp.eq.s32.totalorder %s23, 0
      %p113 = por %p111, %p112
      %s114 = ssub.s32 %s17, %s24
      %p115 = scmp.eq.s32.totalorder %s114, 0
      %s117 = sadd.s32 %s116, 1
      %s118 = scalar_select %p115, %s116, %s117
      %p121 = pneg %p115
      %p122 = scmp.eq.s32.totalorder %s17, 1
      %p123 = por %p121, %p122
      %p124 = scmp.ne.s32.totalorder %s116, %s119
      %p125 = scmp.eq.s32.totalorder %s17, 0
      %p126 = por %p124, %p125
      %p127 = scmp.ne.s32.totalorder %s116, %s119
      %p128 = scmp.eq.s32.totalorder %s22, 1
      %p129 = por %p127, %p128
      %p130 = scmp.ne.s32.totalorder %s119, %s120
      %p131 = scmp.eq.s32.totalorder %s22, 0
      %p132 = por %p130, %p131
      %p133 = scmp.ne.s32.totalorder %s119, %s120
      %p134 = scmp.eq.s32.totalorder %s23, 1
      %p135 = por %p133, %p134
      %p137 = scmp.ne.s32.totalorder %s120, %s136
      %p138 = scmp.eq.s32.totalorder %s23, 0
      %p139 = por %p137, %p138
      %p140 = scmp.le.s32.totalorder 1, %s17
      %p141 = scmp.lt.s32.totalorder %s17, 3
      %p142 = pnand %p140, %p141
      %p143 = pneg %p142
      // Predicated region
      $region9: #{tpu_custom_call.1} parent=5 // pred_check
        _
      $region10: #{tpu_custom_call.1} parent=5 // pred_check_branch
        %145 = sbr.rel (%p142) target = $region12
      $region11: #{tpu_custom_call.1} parent=5 // pred_region
        %s146 = ssub.s32 %s17, 1
        // Predicated region
        $region13: #{tpu_custom_call.1} parent=11 // pred_check
          %p147 = pneg %p64
        $region14: #{tpu_custom_call.1} parent=11 // pred_check_branch
          %149 = sbr.rel (%p147) target = $region16
        $region15: #{tpu_custom_call.1} parent=11 // pred_region
          %s151 = ssub.s32 2048, 2048
          %152 = vsyncadd [#allocation6], %s151
          %s153 = sshll.u32 [#allocation5], 4
          %s154 = int_to_ptr.vmem [resolvable:$true] %s153
          %159 = dma.hbm_to_vmem [thread:$0]  %s1, 2048, %s154, [#allocation6], 64, 64, 4
        $region16: #{tpu_custom_call.1} parent=11 // pred_fallthru
          _
        // Predicated region
        $region17: #{tpu_custom_call.1} parent=11 // pred_check
          %p160 = pneg %p85
        $region18: #{tpu_custom_call.1} parent=11 // pred_check_branch
          %162 = sbr.rel (%p160) target = $region20
        $region19: #{tpu_custom_call.1} parent=11 // pred_region
          %s164 = ssub.s32 1024, 1024
          %165 = vsyncadd [#allocation6], %s164
          %s166 = sshll.u32 [#allocation7], 4
          %s167 = int_to_ptr.vmem [resolvable:$true] %s166
          %172 = dma.hbm_to_vmem [thread:$0]  %s2, 1024, %s167, [#allocation6], 64, 64, 4
        $region20: #{tpu_custom_call.1} parent=11 // pred_fallthru
          _
        // Predicated region
        $region21: #{tpu_custom_call.1} parent=11 // pred_check
          %p173 = pneg %p106
        $region22: #{tpu_custom_call.1} parent=11 // pred_check_branch
          %175 = sbr.rel (%p173) target = $region24
        $region23: #{tpu_custom_call.1} parent=11 // pred_region
          _
        $region24: #{tpu_custom_call.1} parent=11 // pred_fallthru
          _
      $region12: #{tpu_custom_call.1} parent=5 // pred_fallthru
        _
      %p176 = scmp.lt.s32.totalorder %s17, 2
      // Predicated region
      $region25: #{tpu_custom_call.1} parent=5 // pred_check
        %p177 = pneg %p176
      $region26: #{tpu_custom_call.1} parent=5 // pred_check_branch
        %179 = sbr.rel (%p177) target = $region28
      $region27: #{tpu_custom_call.1} parent=5 // pred_region
        // Predicated region
        $region29: #{tpu_custom_call.1} parent=27 // pred_check
          %p180 = pneg %p37
        $region30: #{tpu_custom_call.1} parent=27 // pred_check_branch
          %182 = sbr.rel (%p180) target = $region32
        $region31: #{tpu_custom_call.1} parent=27 // pred_region
          %s183 = sand.u32 %s27, 1
          %s184 = scalar_lea.sflag [#allocation3], %s183
          %s185 = sand.u32 %s27, 1
          %s186 = smul.addr %s185, 128
          %s187 = scalar_lea.vmem [#allocation2], %s186
          %s188 = smul.u32 16, %s17
          %s190 = ssub.s32 2048, 2048
          %191 = vsyncadd %s184, %s190
          %s192 = smul.addr %s188, 2
          %s193 = smul.addr %s192, 64
          %s194 = scalar_lea.hbm %s0, %s193
          %s195 = sshll.u32 %s187, 4
          %s196 = int_to_ptr.vmem [resolvable:$true] %s195
          %201 = dma.hbm_to_vmem [thread:$0]  %s194, 2048, %s196, %s184, 128, 128, 8
        $region32: #{tpu_custom_call.1} parent=27 // pred_fallthru
          _
      $region28: #{tpu_custom_call.1} parent=5 // pred_fallthru
        _
      %p202 = scmp.le.s32.totalorder 1, %s17
      %p203 = scmp.lt.s32.totalorder %s17, 3
      %p204 = pnand %p202, %p203
      %p205 = pneg %p204
      // Predicated region
      $region33: #{tpu_custom_call.1} parent=5 // pred_check
        _
      $region34: #{tpu_custom_call.1} parent=5 // pred_check_branch
        %207 = sbr.rel (%p204) target = $region36
      $region35: #{tpu_custom_call.1} parent=5 // pred_region
        %s208 = ssub.s32 %s17, 1
        %s209 = sand.u32 %s30, 1
        %s210 = scalar_lea.sflag [#allocation3], %s209
        %s211 = sand.u32 %s30, 1
        %s212 = smul.addr %s211, 128
        %s213 = scalar_lea.vmem [#allocation2], %s212
        // Predicated region
        $region37: #{tpu_custom_call.1} parent=35 // pred_check
          %p214 = pneg %p43
        $region38: #{tpu_custom_call.1} parent=35 // pred_check_branch
          %216 = sbr.rel (%p214) target = $region40
        $region39: #{tpu_custom_call.1} parent=35 // pred_region
          %217 = dma.done %s210, 2048
        $region40: #{tpu_custom_call.1} parent=35 // pred_fallthru
          _
        // Predicated region
        $region41: #{tpu_custom_call.1} parent=35 // pred_check
          %p218 = pneg %p64
        $region42: #{tpu_custom_call.1} parent=35 // pred_check_branch
          %220 = sbr.rel (%p218) target = $region44
        $region43: #{tpu_custom_call.1} parent=35 // pred_region
          %221 = dma.done [#allocation6], 2048
        $region44: #{tpu_custom_call.1} parent=35 // pred_fallthru
          _
        // Predicated region
        $region45: #{tpu_custom_call.1} parent=35 // pred_check
          %p222 = pneg %p85
        $region46: #{tpu_custom_call.1} parent=35 // pred_check_branch
          %224 = sbr.rel (%p222) target = $region48
        $region47: #{tpu_custom_call.1} parent=35 // pred_region
          %225 = dma.done [#allocation6], 1024
        $region48: #{tpu_custom_call.1} parent=35 // pred_fallthru
          _
        %s226 = sand.u32 %s30, 1
        %s227 = scalar_lea.sflag [#allocation3], %s226
        %s228 = sand.u32 %s30, 1
        %s229 = smul.addr %s228, 128
        %s230 = scalar_lea.vmem [#allocation2], %s229
        %p231 = pneg %p43
        %p232 = pneg %p40
        %p233 = pneg %p64
        %p234 = pneg %p61
        %p235 = pneg %p85
        %p236 = pneg %p82
        %p237 = pneg %p106
        %p238 = pneg %p103
        %p239 = pneg %p132
        %p240 = pneg %p129
        %s241 = sand.u32 %s119, 1
        %s242 = scalar_lea.sflag [#allocation4], %s241
        %s243 = sand.u32 %s119, 1
        %s244 = smul.addr %s243, 64
        %s245 = scalar_lea.vmem [#allocation8], %s244
        %s246 = smul.u32 16, %s22
        %s247 = smul.u32 16, %s22
        %v249 = vld [vmem:[%s213] sm:$0xff]
        %v250 = vld [vmem:[%s213 + $0x8] sm:$0xff]
        %v251 = vld [vmem:[%s213 + $0x10] sm:$0xff]
        %v252 = vld [vmem:[%s213 + $0x18] sm:$0xff]
        %v253 = vld [vmem:[%s213 + $0x20] sm:$0xff]
        %v254 = vld [vmem:[%s213 + $0x28] sm:$0xff]
        %v255 = vld [vmem:[%s213 + $0x30] sm:$0xff]
        %v256 = vld [vmem:[%s213 + $0x38] sm:$0xff]
        %v257 = vld [vmem:[%s213 + $0x40] sm:$0xff]
        %v258 = vld [vmem:[%s213 + $0x48] sm:$0xff]
        %v259 = vld [vmem:[%s213 + $0x50] sm:$0xff]
        %v260 = vld [vmem:[%s213 + $0x58] sm:$0xff]
        %v261 = vld [vmem:[%s213 + $0x60] sm:$0xff]
        %v262 = vld [vmem:[%s213 + $0x68] sm:$0xff]
        %v263 = vld [vmem:[%s213 + $0x70] sm:$0xff]
        %v264 = vld [vmem:[%s213 + $0x78] sm:$0xff]
        %v265 = vld [vmem:[#allocation5] sm:$0xf]
        %v266 = vld [vmem:[#allocation5 + $0x4] sm:$0xf]
        %v267 = vld [vmem:[#allocation5 + $0x8] sm:$0xf]
        %v268 = vld [vmem:[#allocation5 + $0xc] sm:$0xf]
        %v269 = vld [vmem:[#allocation5 + $0x10] sm:$0xf]
        %v270 = vld [vmem:[#allocation5 + $0x14] sm:$0xf]
        %v271 = vld [vmem:[#allocation5 + $0x18] sm:$0xf]
        %v272 = vld [vmem:[#allocation5 + $0x1c] sm:$0xf]
        %v273 = vld [vmem:[#allocation5 + $0x20] sm:$0xf]
        %v274 = vld [vmem:[#allocation5 + $0x24] sm:$0xf]
        %v275 = vld [vmem:[#allocation5 + $0x28] sm:$0xf]
        %v276 = vld [vmem:[#allocation5 + $0x2c] sm:$0xf]
        %v277 = vld [vmem:[#allocation5 + $0x30] sm:$0xf]
        %v278 = vld [vmem:[#allocation5 + $0x34] sm:$0xf]
        %v279 = vld [vmem:[#allocation5 + $0x38] sm:$0xf]
        %v280 = vld [vmem:[#allocation5 + $0x3c] sm:$0xf]
        %v281 = vld [vmem:[#allocation5 + $0x40] sm:$0xf]
        %v282 = vld [vmem:[#allocation5 + $0x44] sm:$0xf]
        %v283 = vld [vmem:[#allocation5 + $0x48] sm:$0xf]
        %v284 = vld [vmem:[#allocation5 + $0x4c] sm:$0xf]
        %v285 = vld [vmem:[#allocation5 + $0x50] sm:$0xf]
        %v286 = vld [vmem:[#allocation5 + $0x54] sm:$0xf]
        %v287 = vld [vmem:[#allocation5 + $0x58] sm:$0xf]
        %v288 = vld [vmem:[#allocation5 + $0x5c] sm:$0xf]
        %v289 = vld [vmem:[#allocation5 + $0x60] sm:$0xf]
        %v290 = vld [vmem:[#allocation5 + $0x64] sm:$0xf]
        %v291 = vld [vmem:[#allocation5 + $0x68] sm:$0xf]
        %v292 = vld [vmem:[#allocation5 + $0x6c] sm:$0xf]
        %v293 = vld [vmem:[#allocation5 + $0x70] sm:$0xf]
        %v294 = vld [vmem:[#allocation5 + $0x74] sm:$0xf]
        %v295 = vld [vmem:[#allocation5 + $0x78] sm:$0xf]
        %v296 = vld [vmem:[#allocation5 + $0x7c] sm:$0xf]
        %v313 = vunpack.c.l.b16 %v249
        %v314 = vunpack.c.h.b16 %v249
        %v315 = vunpack.c.l.b16 %v250
        %v316 = vunpack.c.h.b16 %v250
        %v317 = vunpack.c.l.b16 %v251
        %v318 = vunpack.c.h.b16 %v251
        %v319 = vunpack.c.l.b16 %v252
        %v320 = vunpack.c.h.b16 %v252
        %v321 = vunpack.c.l.b16 %v253
        %v322 = vunpack.c.h.b16 %v253
        %v323 = vunpack.c.l.b16 %v254
        %v324 = vunpack.c.h.b16 %v254
        %v325 = vunpack.c.l.b16 %v255
        %v326 = vunpack.c.h.b16 %v255
        %v327 = vunpack.c.l.b16 %v256
        %v328 = vunpack.c.h.b16 %v256
        %v329 = vunpack.c.l.b16 %v257
        %v330 = vunpack.c.h.b16 %v257
        %v331 = vunpack.c.l.b16 %v258
        %v332 = vunpack.c.h.b16 %v258
        %v333 = vunpack.c.l.b16 %v259
        %v334 = vunpack.c.h.b16 %v259
        %v335 = vunpack.c.l.b16 %v260
        %v336 = vunpack.c.h.b16 %v260
        %v337 = vunpack.c.l.b16 %v261
        %v338 = vunpack.c.h.b16 %v261
        %v339 = vunpack.c.l.b16 %v262
        %v340 = vunpack.c.h.b16 %v262
        %v341 = vunpack.c.l.b16 %v263
        %v342 = vunpack.c.h.b16 %v263
        %v343 = vunpack.c.l.b16 %v264
        %v344 = vunpack.c.h.b16 %v264
        %v345 = vpack.c.b16 %v315, %v313
        %v346 = vpack.c.b16 %v316, %v314
        %v347 = vpack.c.b16 %v319, %v317
        %v348 = vpack.c.b16 %v320, %v318
        %v349 = vpack.c.b16 %v323, %v321
        %v350 = vpack.c.b16 %v324, %v322
        %v351 = vpack.c.b16 %v327, %v325
        %v352 = vpack.c.b16 %v328, %v326
        %v353 = vpack.c.b16 %v331, %v329
        %v354 = vpack.c.b16 %v332, %v330
        %v355 = vpack.c.b16 %v335, %v333
        %v356 = vpack.c.b16 %v336, %v334
        %v357 = vpack.c.b16 %v339, %v337
        %v358 = vpack.c.b16 %v340, %v338
        %v359 = vpack.c.b16 %v343, %v341
        %v360 = vpack.c.b16 %v344, %v342
        %v409 = vunpack.c.l.b16 %v265
        %v410 = vunpack.c.l.b16 %v266
        %v411 = vunpack.c.l.b16 %v267
        %v412 = vunpack.c.l.b16 %v268
        %v413 = vunpack.c.l.b16 %v269
        %v414 = vunpack.c.l.b16 %v270
        %v415 = vunpack.c.l.b16 %v271
        %v416 = vunpack.c.l.b16 %v272
        %v417 = vunpack.c.l.b16 %v273
        %v418 = vunpack.c.l.b16 %v274
        %v419 = vunpack.c.l.b16 %v275
        %v420 = vunpack.c.l.b16 %v276
        %v421 = vunpack.c.l.b16 %v277
        %v422 = vunpack.c.l.b16 %v278
        %v423 = vunpack.c.l.b16 %v279
        %v424 = vunpack.c.l.b16 %v280
        %v425 = vunpack.c.l.b16 %v281
        %v426 = vunpack.c.l.b16 %v282
        %v427 = vunpack.c.l.b16 %v283
        %v428 = vunpack.c.l.b16 %v284
        %v429 = vunpack.c.l.b16 %v285
        %v430 = vunpack.c.l.b16 %v286
        %v431 = vunpack.c.l.b16 %v287
        %v432 = vunpack.c.l.b16 %v288
        %v433 = vunpack.c.l.b16 %v289
        %v434 = vunpack.c.l.b16 %v290
        %v435 = vunpack.c.l.b16 %v291
        %v436 = vunpack.c.l.b16 %v292
        %v437 = vunpack.c.l.b16 %v293
        %v438 = vunpack.c.l.b16 %v294
        %v439 = vunpack.c.l.b16 %v295
        %v440 = vunpack.c.l.b16 %v296
        %v441 = vpack.c.b16 %v410, %v409
        %v442 = vpack.c.b16 %v412, %v411
        %v443 = vpack.c.b16 %v414, %v413
        %v444 = vpack.c.b16 %v416, %v415
        %v445 = vpack.c.b16 %v418, %v417
        %v446 = vpack.c.b16 %v420, %v419
        %v447 = vpack.c.b16 %v422, %v421
        %v448 = vpack.c.b16 %v424, %v423
        %v449 = vpack.c.b16 %v426, %v425
        %v450 = vpack.c.b16 %v428, %v427
        %v451 = vpack.c.b16 %v430, %v429
        %v452 = vpack.c.b16 %v432, %v431
        %v453 = vpack.c.b16 %v434, %v433
        %v454 = vpack.c.b16 %v436, %v435
        %v455 = vpack.c.b16 %v438, %v437
        %v456 = vpack.c.b16 %v440, %v439
        %473 = vmatprep.subr.bf16.mxu0 0
        %474 = vmatpush1.bf16.msra.mxu0 %v448
        %475 = vmatprep.subr.bf16.mxu0 0
        %476 = vmatpush1.bf16.msra.mxu0 %v447
        %477 = vmatprep.subr.bf16.mxu0 0
        %478 = vmatpush1.bf16.msra.mxu0 %v446
        %479 = vmatprep.subr.bf16.mxu0 0
        %480 = vmatpush1.bf16.msra.mxu0 %v445
        %481 = vmatprep.subr.bf16.mxu0 0
        %482 = vmatpush1.bf16.msra.mxu0 %v444
        %483 = vmatprep.subr.bf16.mxu0 0
        %484 = vmatpush1.bf16.msra.mxu0 %v443
        %485 = vmatprep.subr.bf16.mxu0 0
        %486 = vmatpush1.bf16.msra.mxu0 %v442
        %487 = vmatprep.subr.bf16.mxu0 0
        %488 = vmatpush1.bf16.msra.mxu0 %v441
        %489 = vmatprep.subr.bf16.mxu0 0
        %490 = vmatpush2.bf16.msra.mxu0 %v456
        %491 = vmatprep.subr.bf16.mxu0 0
        %492 = vmatpush2.bf16.msra.mxu0 %v455
        %493 = vmatprep.subr.bf16.mxu0 0
        %494 = vmatpush2.bf16.msra.mxu0 %v454
        %495 = vmatprep.subr.bf16.mxu0 0
        %496 = vmatpush2.bf16.msra.mxu0 %v453
        %497 = vmatprep.subr.bf16.mxu0 0
        %498 = vmatpush2.bf16.msra.mxu0 %v452
        %499 = vmatprep.subr.bf16.mxu0 0
        %500 = vmatpush2.bf16.msra.mxu0 %v451
        %501 = vmatprep.subr.bf16.mxu0 0
        %502 = vmatpush2.bf16.msra.mxu0 %v450
        %503 = vmatprep.subr.bf16.mxu0 0
        %504 = vmatpush2.bf16.msra.mxu0 %v449
        %505 = vmatprep.mubr.bf16.mxu0 %v346
        %506 = vmatmul.mubr.bf16.gmra.mxu0 %v345
        %v507 = vpop.f32.mrf.mxu0
        %v508 = vadd.f32 0.0, %v507
        %v509 = vpop.f32.mrf.mxu0
        %v510 = vpop.f32.mrf.mxu0
        %v511 = vadd.f32 0.0, %v510
        %v512 = vpop.f32.mrf.mxu0
        %513 = vmatprep.mubr.bf16.mxu0 %v348
        %514 = vmatmul.mubr.bf16.gmra.mxu0 %v347
        %v515 = vpop.f32.mrf.mxu0
        %v516 = vadd.f32 0.0, %v515
        %v517 = vpop.f32.mrf.mxu0
        %v518 = vpop.f32.mrf.mxu0
        %v519 = vadd.f32 0.0, %v518
        %v520 = vpop.f32.mrf.mxu0
        %521 = vmatprep.mubr.bf16.mxu0 %v350
        %522 = vmatmul.mubr.bf16.gmra.mxu0 %v349
        %v523 = vpop.f32.mrf.mxu0
        %v524 = vadd.f32 0.0, %v523
        %v525 = vpop.f32.mrf.mxu0
        %v526 = vpop.f32.mrf.mxu0
        %v527 = vadd.f32 0.0, %v526
        %v528 = vpop.f32.mrf.mxu0
        %529 = vmatprep.mubr.bf16.mxu0 %v352
        %530 = vmatmul.mubr.bf16.gmra.mxu0 %v351
        %v531 = vpop.f32.mrf.mxu0
        %v532 = vadd.f32 0.0, %v531
        %v533 = vpop.f32.mrf.mxu0
        %v534 = vpop.f32.mrf.mxu0
        %v535 = vadd.f32 0.0, %v534
        %v536 = vpop.f32.mrf.mxu0
        %537 = vmatprep.mubr.bf16.mxu0 %v354
        %538 = vmatmul.mubr.bf16.gmra.mxu0 %v353
        %v539 = vpop.f32.mrf.mxu0
        %v540 = vadd.f32 0.0, %v539
        %v541 = vpop.f32.mrf.mxu0
        %v542 = vpop.f32.mrf.mxu0
        %v543 = vadd.f32 0.0, %v542
        %v544 = vpop.f32.mrf.mxu0
        %545 = vmatprep.mubr.bf16.mxu0 %v356
        %546 = vmatmul.mubr.bf16.gmra.mxu0 %v355
        %v547 = vpop.f32.mrf.mxu0
        %v548 = vadd.f32 0.0, %v547
        %v549 = vpop.f32.mrf.mxu0
        %v550 = vpop.f32.mrf.mxu0
        %v551 = vadd.f32 0.0, %v550
        %v552 = vpop.f32.mrf.mxu0
        %553 = vmatprep.mubr.bf16.mxu0 %v358
        %554 = vmatmul.mubr.bf16.gmra.mxu0 %v357
        %v555 = vpop.f32.mrf.mxu0
        %v556 = vadd.f32 0.0, %v555
        %v557 = vpop.f32.mrf.mxu0
        %v558 = vpop.f32.mrf.mxu0
        %v559 = vadd.f32 0.0, %v558
        %v560 = vpop.f32.mrf.mxu0
        %561 = vmatprep.mubr.bf16.mxu0 %v360
        %562 = vmatmul.mubr.bf16.gmra.mxu0 %v359
        %v563 = vpop.f32.mrf.mxu0
        %v564 = vadd.f32 0.0, %v563
        %v565 = vpop.f32.mrf.mxu0
        %v566 = vpop.f32.mrf.mxu0
        %v567 = vadd.f32 0.0, %v566
        %v568 = vpop.f32.mrf.mxu0
        %569 = vdwg.mxu0
        %v570 = vpack.c.bf16 %v511, %v508
        %v571 = vpack.c.bf16 %v519, %v516
        %v572 = vpack.c.bf16 %v527, %v524
        %v573 = vpack.c.bf16 %v535, %v532
        %v574 = vpack.c.bf16 %v543, %v540
        %v575 = vpack.c.bf16 %v551, %v548
        %v576 = vpack.c.bf16 %v559, %v556
        %v577 = vpack.c.bf16 %v567, %v564
        %v578 = vld [vmem:[#allocation7] sm:$0xf]
        %v579 = vld [vmem:[#allocation7 + $0x4] sm:$0xf]
        %v580 = vld [vmem:[#allocation7 + $0x8] sm:$0xf]
        %v581 = vld [vmem:[#allocation7 + $0xc] sm:$0xf]
        %v582 = vld [vmem:[#allocation7 + $0x10] sm:$0xf]
        %v583 = vld [vmem:[#allocation7 + $0x14] sm:$0xf]
        %v584 = vld [vmem:[#allocation7 + $0x18] sm:$0xf]
        %v585 = vld [vmem:[#allocation7 + $0x1c] sm:$0xf]
        %v586 = vld [vmem:[#allocation7 + $0x20] sm:$0xf]
        %v587 = vld [vmem:[#allocation7 + $0x24] sm:$0xf]
        %v588 = vld [vmem:[#allocation7 + $0x28] sm:$0xf]
        %v589 = vld [vmem:[#allocation7 + $0x2c] sm:$0xf]
        %v590 = vld [vmem:[#allocation7 + $0x30] sm:$0xf]
        %v591 = vld [vmem:[#allocation7 + $0x34] sm:$0xf]
        %v592 = vld [vmem:[#allocation7 + $0x38] sm:$0xf]
        %v593 = vld [vmem:[#allocation7 + $0x3c] sm:$0xf]
        %v594 = vld [vmem:[%s3] sm:$0x1]
        %v596 = vlaneseq
        %v597 = vshrl.u32 %v596, 7
        %v598 = vsub.s32 0, %v597
        %v599 = vrot.slane %v594, %v598
        %v617 = vunpack.c.l.b16 %v578
        %v618 = vunpack.c.l.b16 %v579
        %v619 = vunpack.c.l.b16 %v580
        %v620 = vunpack.c.l.b16 %v581
        %v621 = vunpack.c.l.b16 %v582
        %v622 = vunpack.c.l.b16 %v583
        %v623 = vunpack.c.l.b16 %v584
        %v624 = vunpack.c.l.b16 %v585
        %v625 = vunpack.c.l.b16 %v586
        %v626 = vunpack.c.l.b16 %v587
        %v627 = vunpack.c.l.b16 %v588
        %v628 = vunpack.c.l.b16 %v589
        %v629 = vunpack.c.l.b16 %v590
        %v630 = vunpack.c.l.b16 %v591
        %v631 = vunpack.c.l.b16 %v592
        %v632 = vunpack.c.l.b16 %v593
        %v633 = vpack.c.b16 %v618, %v617
        %v634 = vpack.c.b16 %v620, %v619
        %v635 = vpack.c.b16 %v622, %v621
        %v636 = vpack.c.b16 %v624, %v623
        %v637 = vpack.c.b16 %v626, %v625
        %v638 = vpack.c.b16 %v628, %v627
        %v639 = vpack.c.b16 %v630, %v629
        %v640 = vpack.c.b16 %v632, %v631
        %649 = vmatprep.subr.bf16.mxu0 0
        %650 = vmatpush1.bf16.msra.mxu0 %v640
        %651 = vmatprep.subr.bf16.mxu0 0
        %652 = vmatpush1.bf16.msra.mxu0 %v639
        %653 = vmatprep.subr.bf16.mxu0 0
        %654 = vmatpush1.bf16.msra.mxu0 %v638
        %655 = vmatprep.subr.bf16.mxu0 0
        %656 = vmatpush1.bf16.msra.mxu0 %v637
        %657 = vmatprep.subr.bf16.mxu0 0
        %658 = vmatpush1.bf16.msra.mxu0 %v636
        %659 = vmatprep.subr.bf16.mxu0 0
        %660 = vmatpush1.bf16.msra.mxu0 %v635
        %661 = vmatprep.subr.bf16.mxu0 0
        %662 = vmatpush1.bf16.msra.mxu0 %v634
        %663 = vmatprep.subr.bf16.mxu0 0
        %664 = vmatpush1.bf16.msra.mxu0 %v633
        %665 = vmatprep.subr.bf16.mxu0 0
        %666 = vmatpush2.bf16.msra.mxu0 0
        %667 = vmatprep.subr.bf16.mxu0 0
        %668 = vmatpush2.bf16.msra.mxu0 0
        %669 = vmatprep.subr.bf16.mxu0 0
        %670 = vmatpush2.bf16.msra.mxu0 0
        %671 = vmatprep.subr.bf16.mxu0 0
        %672 = vmatpush2.bf16.msra.mxu0 0
        %673 = vmatprep.subr.bf16.mxu0 0
        %674 = vmatpush2.bf16.msra.mxu0 0
        %675 = vmatprep.subr.bf16.mxu0 0
        %676 = vmatpush2.bf16.msra.mxu0 0
        %677 = vmatprep.subr.bf16.mxu0 0
        %678 = vmatpush2.bf16.msra.mxu0 0
        %679 = vmatprep.subr.bf16.mxu0 0
        %680 = vmatpush2.bf16.msra.mxu0 0
        %681 = vmatprep.mubr.bf16.mxu0 0
        %682 = vmatmul.mubr.bf16.gmra.mxu0 %v570
        %v683 = vpop.f32.mrf.mxu0
        %v684 = vadd.f32 %v599, %v683
        %v685 = vpop.f32.mrf.mxu0
        %v686 = vpop.f32.mrf.mxu0
        %v687 = vadd.f32 %v599, %v686
        %v688 = vpop.f32.mrf.mxu0
        %689 = vmatprep.mubr.bf16.mxu0 0
        %690 = vmatmul.mubr.bf16.gmra.mxu0 %v571
        %v691 = vpop.f32.mrf.mxu0
        %v692 = vadd.f32 %v599, %v691
        %v693 = vpop.f32.mrf.mxu0
        %v694 = vpop.f32.mrf.mxu0
        %v695 = vadd.f32 %v599, %v694
        %v696 = vpop.f32.mrf.mxu0
        %697 = vmatprep.mubr.bf16.mxu0 0
        %698 = vmatmul.mubr.bf16.gmra.mxu0 %v572
        %v699 = vpop.f32.mrf.mxu0
        %v700 = vadd.f32 %v599, %v699
        %v701 = vpop.f32.mrf.mxu0
        %v702 = vpop.f32.mrf.mxu0
        %v703 = vadd.f32 %v599, %v702
        %v704 = vpop.f32.mrf.mxu0
        %705 = vmatprep.mubr.bf16.mxu0 0
        %706 = vmatmul.mubr.bf16.gmra.mxu0 %v573
        %v707 = vpop.f32.mrf.mxu0
        %v708 = vadd.f32 %v599, %v707
        %v709 = vpop.f32.mrf.mxu0
        %v710 = vpop.f32.mrf.mxu0
        %v711 = vadd.f32 %v599, %v710
        %v712 = vpop.f32.mrf.mxu0
        %713 = vmatprep.mubr.bf16.mxu0 0
        %714 = vmatmul.mubr.bf16.gmra.mxu0 %v574
        %v715 = vpop.f32.mrf.mxu0
        %v716 = vadd.f32 %v599, %v715
        %v717 = vpop.f32.mrf.mxu0
        %v718 = vpop.f32.mrf.mxu0
        %v719 = vadd.f32 %v599, %v718
        %v720 = vpop.f32.mrf.mxu0
        %721 = vmatprep.mubr.bf16.mxu0 0
        %722 = vmatmul.mubr.bf16.gmra.mxu0 %v575
        %v723 = vpop.f32.mrf.mxu0
        %v724 = vadd.f32 %v599, %v723
        %v725 = vpop.f32.mrf.mxu0
        %v726 = vpop.f32.mrf.mxu0
        %v727 = vadd.f32 %v599, %v726
        %v728 = vpop.f32.mrf.mxu0
        %729 = vmatprep.mubr.bf16.mxu0 0
        %730 = vmatmul.mubr.bf16.gmra.mxu0 %v576
        %v731 = vpop.f32.mrf.mxu0
        %v732 = vadd.f32 %v599, %v731
        %v733 = vpop.f32.mrf.mxu0
        %v734 = vpop.f32.mrf.mxu0
        %v735 = vadd.f32 %v599, %v734
        %v736 = vpop.f32.mrf.mxu0
        %737 = vmatprep.mubr.bf16.mxu0 0
        %738 = vmatmul.mubr.bf16.gmra.mxu0 %v577
        %v739 = vpop.f32.mrf.mxu0
        %v740 = vadd.f32 %v599, %v739
        %v741 = vpop.f32.mrf.mxu0
        %v742 = vpop.f32.mrf.mxu0
        %v743 = vadd.f32 %v599, %v742
        %v744 = vpop.f32.mrf.mxu0
        %745 = vdwg.mxu0
        %v746 = vmax.f32 %v684, 0.0
        %v747 = vmax.f32 %v687, 0.0
        %v748 = vmax.f32 %v692, 0.0
        %v749 = vmax.f32 %v695, 0.0
        %v750 = vmax.f32 %v700, 0.0
        %v751 = vmax.f32 %v703, 0.0
        %v752 = vmax.f32 %v708, 0.0
        %v753 = vmax.f32 %v711, 0.0
        %v754 = vmax.f32 %v716, 0.0
        %v755 = vmax.f32 %v719, 0.0
        %v756 = vmax.f32 %v724, 0.0
        %v757 = vmax.f32 %v727, 0.0
        %v758 = vmax.f32 %v732, 0.0
        %v759 = vmax.f32 %v735, 0.0
        %v760 = vmax.f32 %v740, 0.0
        %v761 = vmax.f32 %v743, 0.0
        %v762 = vpack.c.bf16 %v747, %v746
        %v763 = vpack.c.bf16 %v749, %v748
        %v764 = vpack.c.bf16 %v751, %v750
        %v765 = vpack.c.bf16 %v753, %v752
        %v766 = vpack.c.bf16 %v755, %v754
        %v767 = vpack.c.bf16 %v757, %v756
        %v768 = vpack.c.bf16 %v759, %v758
        %v769 = vpack.c.bf16 %v761, %v760
        %v778 = vunpack.c.l.b16 %v762
        %v779 = vunpack.c.h.b16 %v762
        %v780 = vunpack.c.l.b16 %v763
        %v781 = vunpack.c.h.b16 %v763
        %v782 = vunpack.c.l.b16 %v764
        %v783 = vunpack.c.h.b16 %v764
        %v784 = vunpack.c.l.b16 %v765
        %v785 = vunpack.c.h.b16 %v765
        %v786 = vunpack.c.l.b16 %v766
        %v787 = vunpack.c.h.b16 %v766
        %v788 = vunpack.c.l.b16 %v767
        %v789 = vunpack.c.h.b16 %v767
        %v790 = vunpack.c.l.b16 %v768
        %v791 = vunpack.c.h.b16 %v768
        %v792 = vunpack.c.l.b16 %v769
        %v793 = vunpack.c.h.b16 %v769
        %v794 = vpack.c.b16 %v778, %v778
        %v795 = vpack.c.b16 %v779, %v779
        %v796 = vpack.c.b16 %v780, %v780
        %v797 = vpack.c.b16 %v781, %v781
        %v798 = vpack.c.b16 %v782, %v782
        %v799 = vpack.c.b16 %v783, %v783
        %v800 = vpack.c.b16 %v784, %v784
        %v801 = vpack.c.b16 %v785, %v785
        %v802 = vpack.c.b16 %v786, %v786
        %v803 = vpack.c.b16 %v787, %v787
        %v804 = vpack.c.b16 %v788, %v788
        %v805 = vpack.c.b16 %v789, %v789
        %v806 = vpack.c.b16 %v790, %v790
        %v807 = vpack.c.b16 %v791, %v791
        %v808 = vpack.c.b16 %v792, %v792
        %v809 = vpack.c.b16 %v793, %v793
        %826 = vst [vmem:[%s245] sm:$0xf] %v794
        %827 = vst [vmem:[%s245 + $0x4] sm:$0xf] %v795
        %828 = vst [vmem:[%s245 + $0x8] sm:$0xf] %v796
        %829 = vst [vmem:[%s245 + $0xc] sm:$0xf] %v797
        %830 = vst [vmem:[%s245 + $0x10] sm:$0xf] %v798
        %831 = vst [vmem:[%s245 + $0x14] sm:$0xf] %v799
        %832 = vst [vmem:[%s245 + $0x18] sm:$0xf] %v800
        %833 = vst [vmem:[%s245 + $0x1c] sm:$0xf] %v801
        %834 = vst [vmem:[%s245 + $0x20] sm:$0xf] %v802
        %835 = vst [vmem:[%s245 + $0x24] sm:$0xf] %v803
        %836 = vst [vmem:[%s245 + $0x28] sm:$0xf] %v804
        %837 = vst [vmem:[%s245 + $0x2c] sm:$0xf] %v805
        %838 = vst [vmem:[%s245 + $0x30] sm:$0xf] %v806
        %839 = vst [vmem:[%s245 + $0x34] sm:$0xf] %v807
        %840 = vst [vmem:[%s245 + $0x38] sm:$0xf] %v808
        %841 = vst [vmem:[%s245 + $0x3c] sm:$0xf] %v809
        %s842 = sand.u32 %s119, 1
        %s843 = scalar_lea.sflag [#allocation4], %s842
        %s844 = sand.u32 %s119, 1
        %s845 = smul.addr %s844, 64
        %s846 = scalar_lea.vmem [#allocation8], %s845
        // Predicated region
        $region49: #{tpu_custom_call.1} parent=35 // pred_check
          %p847 = pneg %p129
        $region50: #{tpu_custom_call.1} parent=35 // pred_check_branch
          %849 = sbr.rel (%p847) target = $region52
        $region51: #{tpu_custom_call.1} parent=35 // pred_region
          %s850 = smul.u32 16, %s22
          %s852 = ssub.s32 1024, 1024
          %853 = vsyncadd %s843, %s852
          %s854 = smul.addr %s850, 64
          %s855 = scalar_lea.hbm %s4, %s854
          %s856 = sshll.u32 %s846, 4
          %s857 = int_to_ptr.vmem [resolvable:$true] %s856
          %862 = dma.vmem_to_hbm [thread:$0]  %s857, 1024, %s855, %s843, 64, 64, 4
        $region52: #{tpu_custom_call.1} parent=35 // pred_fallthru
          _
      $region36: #{tpu_custom_call.1} parent=5 // pred_fallthru
        _
      %p863 = scmp.le.s32.totalorder 2, %s17
      // Predicated region
      $region53: #{tpu_custom_call.1} parent=5 // pred_check
        %p864 = pneg %p863
      $region54: #{tpu_custom_call.1} parent=5 // pred_check_branch
        %866 = sbr.rel (%p864) target = $region56
      $region55: #{tpu_custom_call.1} parent=5 // pred_region
        %s867 = ssub.s32 %s17, 2
        // Predicated region
        $region57: #{tpu_custom_call.1} parent=55 // pred_check
          %p868 = pneg %p135
        $region58: #{tpu_custom_call.1} parent=55 // pred_check_branch
          %870 = sbr.rel (%p868) target = $region60
        $region59: #{tpu_custom_call.1} parent=55 // pred_region
          %s871 = sand.u32 %s120, 1
          %s872 = scalar_lea.sflag [#allocation4], %s871
          %s873 = sand.u32 %s120, 1
          %s874 = smul.addr %s873, 64
          %s875 = scalar_lea.vmem [#allocation8], %s874
          %876 = dma.done %s872, 1024
        $region60: #{tpu_custom_call.1} parent=55 // pred_fallthru
          _
      $region56: #{tpu_custom_call.1} parent=5 // pred_fallthru
        _
    $region6: #{tpu_custom_call.1} parent=1 // loop_footer
      %s21 = sadd.s32 1, %s17
    $region7: #{tpu_custom_call.1} parent=1 // loop_footer_branch
      %16 = sbr.rel target = $region3
    $region8: #{tpu_custom_call.1} parent=1 // loop_exit
      _
    %877 = vsyncpa [#allocation3], 1
    %s878 = scalar_lea.sflag [#allocation3], 1
    %879 = vsyncpa %s878, 1
    %880 = vsyncpa [#allocation6], 1
    %881 = vsyncpa [#allocation4], 1
    %s882 = scalar_lea.sflag [#allocation4], 1
    %883 = vsyncpa %s882, 1

</llo_original>
